<compile_context>
chip_gen: v7x
topology: tpu7x:2x2x1
jax: 0.10.0
libtpu: 0.0.40
codegen_flags: <defaults>
</compile_context>

<pallas_src>
import jax
import jax.numpy as jnp
from jax.experimental import pallas as pl
from jax.experimental.pallas import tpu as pltpu


def lr_kernel(x_ref, w_ref, b_ref, o_ref):
    # x_ref: (TB, D) f32 VMEM tile (pipelined over the batch grid)
    # w_ref: (1, D)  f32 VMEM, resident across all grid steps
    # b_ref: (1, 1)  f32 SMEM scalar
    # o_ref: (1, 1, TB) f32 lane-dense output tile
    x = x_ref[...]
    w = w_ref[...]
    # N=1 matmul as VPU mul + XLU lane reduction (avoids a wasteful N=1 MXU op).
    z = jnp.sum(x * w, axis=-1)                 # (TB,) f32, lane-dense epilogue
    z = z + b_ref[0, 0]                         # scalar bias from SMEM
    o_ref[...] = jax.nn.sigmoid(z)[None, None, :].astype(o_ref.dtype)


def lr_forward(x, w, b, *, batch_tile=4096, vmem_limit_bytes=40 * 1024 * 1024):
    """x: (B, D) f32, w: (D, 1) f32, b: (1,)/(1,1) f32  ->  (B, 1) f32.

    v5e/v6e may use batch_tile=8192, vmem_limit_bytes=64 MiB; keep the defaults
    (4096 / 40 MiB) on v7x (64 MiB VMEM per TensorCore, both cores active).
    """
    B, D = x.shape
    assert w.shape == (D, 1)

    x = x.astype(jnp.float32)                       # no-op if already f32
    w_row = w.astype(jnp.float32).T                 # (1, D), resident in VMEM
    b = jnp.asarray(b, jnp.float32).reshape(1, 1)

    # Sublane-aligned batch tile, capped at `batch_tile`. No padding of x:
    # Pallas masks the partial last block (rows are independent, so any garbage
    # rows in that block produce garbage lanes we slice off below).
    TB = min(batch_tile, pl.cdiv(B, 8) * 8)
    num_tiles = pl.cdiv(B, TB)

    out = pl.pallas_call(
        lr_kernel,
        out_shape=jax.ShapeDtypeStruct((num_tiles, 1, TB), jnp.float32),
        grid_spec=pltpu.PrefetchScalarGridSpec(
            num_scalar_prefetch=0,
            grid=(num_tiles,),
            in_specs=[
                # Full feature dim per block -> single contiguous HBM region/tile.
                pl.BlockSpec((TB, D), lambda i: (i, 0)),
                # Weight row resident across all grid steps.
                pl.BlockSpec((1, D), lambda i: (0, 0)),
                # Scalar bias in SMEM (no per-step DMA stream).
                pl.BlockSpec(memory_space=pltpu.MemorySpace.SMEM),
            ],
            # Lane-dense output row per tile.
            out_specs=pl.BlockSpec((1, 1, TB), lambda i: (i, 0, 0)),
        ),
        compiler_params=pltpu.CompilerParams(
            dimension_semantics=("parallel",),      # shard batch tiles over TCs (v7x)
            vmem_limit_bytes=vmem_limit_bytes,
        ),
    )(x, w_row, b)

    # Tiny (num_tiles*TB*4-byte) relayout back to (B, 1); negligible vs x stream.
    return out.reshape(num_tiles * TB, 1)[:B]


def lr_reference(x, w, b):
    z = jnp.dot(x, w, precision=jax.lax.Precision.HIGHEST) + jnp.reshape(b, (1, 1))
    return jax.nn.sigmoid(z)


if __name__ == "__main__":
    key = jax.random.PRNGKey(0)
    kx, kw, kb = jax.random.split(key, 3)

    B, D = 8, 784  # small batch, features=784 as implied by nn.Linear(784, 1)

    x = jax.random.normal(kx, (B, D), dtype=jnp.float32)

    # Deterministic parameter init mirroring nn.Linear's uniform(-1/sqrt(D), 1/sqrt(D)).
    bound = 1.0 / jnp.sqrt(jnp.float32(D))
    w = jax.random.uniform(kw, (D, 1), minval=-bound, maxval=bound, dtype=jnp.float32)
    b = jax.random.uniform(kb, (1, 1), minval=-bound, maxval=bound, dtype=jnp.float32)

    out = lr_forward(x, w, b)
    jax.block_until_ready(out)

    ref = lr_reference(x, w, b)
    assert out.shape == (B, 1)
    assert jnp.allclose(out, ref, atol=1e-5, rtol=1e-5)

    print("KERNEL_OK")
</pallas_src>

<mosaic_0001>
module attributes {stable_mosaic.version = 11 : i64} {
  func.func @lr_kernel(%arg0: i32, %arg1: memref<8x784xf32, #tpu.memory_space<vmem>>, %arg2: memref<1x784xf32, #tpu.memory_space<vmem>>, %arg3: memref<1x1xf32, #tpu.memory_space<smem>>, %arg4: memref<1x1x8xf32, #tpu.memory_space<vmem>>) attributes {dimension_semantics = [#tpu.dimension_semantics<parallel>], iteration_bounds = array<i64: 1>, scalar_prefetch = 0 : i64, scratch_operands = 0 : i64, tpu.core_type = #tpu.core_type<tc>, window_params = [{transform_indices = @transform_0, window_bounds = array<i64: 8, 784>}, {pipeline_mode = #tpu.pipeline_mode<synchronous>, transform_indices = @transform_1, window_bounds = array<i64: 1, 784>}, {transform_indices = @transform_2, window_bounds = array<i64: 1, 1>}, {transform_indices = @transform_3, window_bounds = array<i64: 1, 1, 8>}]} {
    %c0 = arith.constant 0 : index
    %c0_0 = arith.constant 0 : index
    %0 = vector.load %arg1[%c0, %c0_0] : memref<8x784xf32, #tpu.memory_space<vmem>>, vector<8x784xf32>
    %c0_1 = arith.constant 0 : index
    %c0_2 = arith.constant 0 : index
    %1 = vector.load %arg2[%c0_1, %c0_2] : memref<1x784xf32, #tpu.memory_space<vmem>>, vector<1x784xf32>
    %2 = vector.broadcast %1 : vector<1x784xf32> to vector<8x784xf32>
    %3 = arith.mulf %0, %2 : vector<8x784xf32>
    %cst = arith.constant dense<0.000000e+00> : vector<8xf32>
    %4 = vector.multi_reduction <add>, %3, %cst [1] : vector<8x784xf32> to vector<8xf32>
    %c0_3 = arith.constant 0 : index
    %c0_4 = arith.constant 0 : index
    %5 = memref.load %arg3[%c0_3, %c0_4] : memref<1x1xf32, #tpu.memory_space<smem>>
    %6 = vector.broadcast %5 : f32 to vector<8xf32>
    %7 = arith.addf %4, %6 : vector<8xf32>
    %8 = arith.negf %7 : vector<8xf32>
    %9 = math.exp %8 : vector<8xf32>
    %cst_5 = arith.constant 1.000000e+00 : f32
    %10 = vector.broadcast %cst_5 : f32 to vector<8xf32>
    %11 = arith.addf %10, %9 : vector<8xf32>
    %12 = arith.divf %10, %11 : vector<8xf32>
    %13 = vector.shape_cast %12 : vector<8xf32> to vector<1x1x8xf32>
    %c0_6 = arith.constant 0 : index
    %c0_7 = arith.constant 0 : index
    %c0_8 = arith.constant 0 : index
    %14 = vector.load %arg4[%c0_6, %c0_7, %c0_8] : memref<1x1x8xf32, #tpu.memory_space<vmem>>, vector<1x1x8xf32>
    tpu.vector_store %arg4[%c0_6, %c0_7, %c0_8], %13 {strides = array<i32>} : memref<1x1x8xf32, #tpu.memory_space<vmem>>, vector<1x1x8xf32>,
    return
  }
  func.func @transform_0(%arg0: i32) -> (i32, i32) {
    %c0_i32 = arith.constant 0 : i32
    %c0_i32_0 = arith.constant 0 : i32
    return %arg0, %c0_i32 : i32, i32
  }
  func.func @transform_1(%arg0: i32) -> (i32, i32) {
    %c0_i32 = arith.constant 0 : i32
    %c0_i32_0 = arith.constant 0 : i32
    %c0_i32_1 = arith.constant 0 : i32
    return %c0_i32, %c0_i32_0 : i32, i32
  }
  func.func @transform_2(%arg0: i32) -> (i32, i32) {
    %c0_i32 = arith.constant 0 : i32
    %c0_i32_0 = arith.constant 0 : i32
    %c0_i32_1 = arith.constant 0 : i32
    return %c0_i32, %c0_i32_0 : i32, i32
  }
  func.func @transform_3(%arg0: i32) -> (i32, i32, i32) {
    %c0_i32 = arith.constant 0 : i32
    %c0_i32_0 = arith.constant 0 : i32
    %c0_i32_1 = arith.constant 0 : i32
    return %arg0, %c0_i32, %c0_i32_0 : i32, i32, i32
  }
}

</mosaic_0001>

<llo_original>
// kernel: tpu_custom_call.1
$region0: #{tpu_custom_call.1}
  #allocation0 [shape = 'u32[]', space=smem, size = 0x4, offset = 0x4, fixed_abs, tag = 'smem constant byte address 0x4 - core index']
  #allocation1 [shape = 'u32[144,128]{1,0:T(1,128)}', space=vmem, size = 0x12000, scoped, tag = 'internal scratch']
  #allocation2 [shape = 'f32[1,1]{1,0:T(1,128)S(6)}', space=smem, size = 0x200, scoped, tag = 'scoped memory for tpu_custom_call.1']
  %s0 = inlined_call_operand.hbm [shape: f32[8,784], index: 0, kind: input, shape index: {}]
  %s1 = inlined_call_operand.vmem [shape: f32[1,784], index: 1, kind: input, shape index: {}]
  %s2 = inlined_call_operand.<no memory space> [shape: f32[1,1], index: 2, kind: input, shape index: {}]
  %s3 = inlined_call_operand.hbm [shape: f32[1,1,8], index: 3, kind: output, shape index: {}]
  %s4 = sld [smem:[#allocation0]]
  $region26: #{tpu_custom_call.1} parent=0
    _
  %s6 = ssub.s32 1, %s4
  %s7 = scalar_select 0, %s6, %s4
  %8 = sst [smem:[#allocation2]] %s2
  $region1: #{tpu_custom_call.1} parent=0
    #allocation3 [shape = 'u8[28672]{0}', space=vmem, size = 0x7000, scoped, tag = 'input window, operand 0, single buffered']
    #allocation4 [shape = 's32[1]{0}', space=sflag, size = 0x4, scoped, tag = 'scoped memory for tpu_custom_call.1']
    #allocation5 [shape = 's32[1]{0}', space=sflag, size = 0x4, scoped, tag = 'scoped memory for tpu_custom_call.1']
    #allocation6 [shape = 'u8[512]{0}', space=vmem, size = 0x400, scoped, tag = 'output window, operand 0, single buffered']
    %9 = vsyncpa [#allocation4], 0
    %10 = vsyncpa [#allocation5], 0
    // Predicated region
    $region2: #{tpu_custom_call.1} parent=1 // pred_check
      _
    $region3: #{tpu_custom_call.1} parent=1 // pred_check_branch
      %12 = sbr.rel (0) target = $region5
    $region4: #{tpu_custom_call.1} parent=1 // pred_region
      %s14 = ssub.s32 896, 896
      %15 = vsyncadd [#allocation4], %s14
      %s17 = sshll.u32 [#allocation3], 4
      %s18 = int_to_ptr.vmem [resolvable:$true] %s17
      %20 = dma.hbm_to_vmem [thread:$0]  %s0, 896, %s18, [#allocation4]
    $region5: #{tpu_custom_call.1} parent=1 // pred_fallthru
      _
    // Predicated region
    $region6: #{tpu_custom_call.1} parent=1 // pred_check
      _
    $region7: #{tpu_custom_call.1} parent=1 // pred_check_branch
      %22 = sbr.rel (0) target = $region9
    $region8: #{tpu_custom_call.1} parent=1 // pred_region
      _
    $region9: #{tpu_custom_call.1} parent=1 // pred_fallthru
      _
    // Predicated region
    $region10: #{tpu_custom_call.1} parent=1 // pred_check
      _
    $region11: #{tpu_custom_call.1} parent=1 // pred_check_branch
      %24 = sbr.rel (0) target = $region13
    $region12: #{tpu_custom_call.1} parent=1 // pred_region
      _
    $region13: #{tpu_custom_call.1} parent=1 // pred_fallthru
      _
    // Predicated region
    $region14: #{tpu_custom_call.1} parent=1 // pred_check
      _
    $region15: #{tpu_custom_call.1} parent=1 // pred_check_branch
      %26 = sbr.rel (0) target = $region17
    $region16: #{tpu_custom_call.1} parent=1 // pred_region
      %27 = dma.done [#allocation4], 896
    $region17: #{tpu_custom_call.1} parent=1 // pred_fallthru
      _
    %v28 = vld [vmem:[#allocation3] sm:$0xff]
    %v29 = vld [vmem:[#allocation3 + $0x8] sm:$0xff]
    %v30 = vld [vmem:[#allocation3 + $0x10] sm:$0xff]
    %v31 = vld [vmem:[#allocation3 + $0x18] sm:$0xff]
    %v32 = vld [vmem:[#allocation3 + $0x20] sm:$0xff]
    %v33 = vld [vmem:[#allocation3 + $0x28] sm:$0xff]
    %v34 = vld [vmem:[#allocation3 + $0x30] sm:$0xff]
    %v35 = vld [vmem:[%s1] sm:$0x7f]
    %v37 = vlaneseq
    %v38 = vshrl.u32 %v37, 7
    %v39 = vsub.s32 0, %v38
    %v40 = vrot.slane %v35, %v39
    %v41 = vlaneseq
    %v42 = vshrl.u32 %v41, 7
    %v43 = vsub.s32 1, %v42
    %v44 = vrot.slane %v35, %v43
    %v45 = vlaneseq
    %v46 = vshrl.u32 %v45, 7
    %v47 = vsub.s32 2, %v46
    %v48 = vrot.slane %v35, %v47
    %v49 = vlaneseq
    %v50 = vshrl.u32 %v49, 7
    %v51 = vsub.s32 3, %v50
    %v52 = vrot.slane %v35, %v51
    %v53 = vlaneseq
    %v54 = vshrl.u32 %v53, 7
    %v55 = vsub.s32 4, %v54
    %v56 = vrot.slane %v35, %v55
    %v57 = vlaneseq
    %v58 = vshrl.u32 %v57, 7
    %v59 = vsub.s32 5, %v58
    %v60 = vrot.slane %v35, %v59
    %v61 = vlaneseq
    %v62 = vshrl.u32 %v61, 7
    %v63 = vsub.s32 6, %v62
    %v64 = vrot.slane %v35, %v63
    %v72 = vmul.f32 %v28, %v40
    %v73 = vmul.f32 %v29, %v44
    %v74 = vmul.f32 %v30, %v48
    %v75 = vmul.f32 %v31, %v52
    %v76 = vmul.f32 %v32, %v56
    %v77 = vmul.f32 %v33, %v60
    %v78 = vmul.f32 %v34, %v64
    %v79 = vadd.f32 %v72, %v73
    %v80 = vadd.f32 %v79, %v74
    %v81 = vadd.f32 %v80, %v75
    %v82 = vadd.f32 %v81, %v76
    %v83 = vadd.f32 %v82, %v77
    %vm84 = vcmask 130048
    %v85 = vsel %vm84, %v78, 0.0
    %v86 = vadd.f32 %v83, %v85
    %87 = vadd.xlane.f32.xlu0 %v86
    %v88 = vpop.xlane.xlu0 %87
    %s89 = sld [smem:[#allocation2]]
    %v90 = vstv %s89
    %v91 = vadd.f32 %v88, %v90
    %v92 = vxor.u32 %v91, 2147483648
    %v93 = vmul.f32 %v92, 1.442695
    %v94 = vpow.pop %v93
    %v95 = vadd.f32 %v94, 1.0
    %v96 = vrcp.pop %v95
    %v97 = vmul.f32 1.0, %v96
    %v99 = vlaneseq
    %v100 = vand.u32 %v99, 127
    %v101 = vlaneseq
    %v102 = vshrl.u32 %v101, 7
    %v103 = vsub.s32 %v100, %v102
    %v104 = vrot.slane %v97, %v103
    %vm106 = vcmask 57344
    %107 = vst.msk [vmem:[#allocation6] sm:$0x1] %vm106, %v104
    // Predicated region
    $region18: #{tpu_custom_call.1} parent=1 // pred_check
      _
    $region19: #{tpu_custom_call.1} parent=1 // pred_check_branch
      %109 = sbr.rel (0) target = $region21
    $region20: #{tpu_custom_call.1} parent=1 // pred_region
      %s111 = ssub.s32 16, 16
      %112 = vsyncadd [#allocation5], %s111
      %s114 = sshll.u32 [#allocation6], 4
      %s115 = int_to_ptr.vmem [resolvable:$true] %s114
      %117 = dma.vmem_to_hbm [thread:$0]  %s115, 16, %s3, [#allocation5]
    $region21: #{tpu_custom_call.1} parent=1 // pred_fallthru
      _
    // Predicated region
    $region22: #{tpu_custom_call.1} parent=1 // pred_check
      _
    $region23: #{tpu_custom_call.1} parent=1 // pred_check_branch
      %119 = sbr.rel (0) target = $region25
    $region24: #{tpu_custom_call.1} parent=1 // pred_region
      %120 = dma.done [#allocation5], 16
    $region25: #{tpu_custom_call.1} parent=1 // pred_fallthru
      _
    %121 = vsyncpa [#allocation4], 1
    %122 = vsyncpa [#allocation5], 1

</llo_original>
